<compile_context>
chip_gen: v7x
topology: tpu7x:2x2x1
jax: 0.10.0
libtpu: 0.0.40
codegen_flags: <defaults>
</compile_context>

<pallas_src>
import math
import jax
import jax.numpy as jnp
from jax.experimental import pallas as pl
from jax.experimental.pallas import tpu as pltpu


def branch_kernel(x_ref, yaw_ref, w1_ref, b1_ref, w2_ref, b2_ref, o_ref):
    # x_ref:   (TB, F)  input tile (f32)
    # yaw_ref: (TB, 1)  per-row yaw scale (f32)
    # w1/w2:   (F, F)   weights already transposed to (in, out); f32 or bf16
    # b1/b2:   (1, F)   biases (f32)
    x = x_ref[...]            # hoisted once: matmul operand + residual
    yaw = yaw_ref[...]        # hoisted once
    mxu_dtype = w1_ref.dtype  # bf16 on the v6e/v7x fast path, f32 otherwise

    # fc1 -> relu  (MXU, f32 accumulation)
    h = jnp.dot(x.astype(mxu_dtype), w1_ref[...],
                preferred_element_type=jnp.float32) + b1_ref[...]
    h = jnp.maximum(h, 0.0)

    # fc2 -> relu
    h = jnp.dot(h.astype(mxu_dtype), w2_ref[...],
                preferred_element_type=jnp.float32) + b2_ref[...]
    h = jnp.maximum(h, 0.0)

    # residual: yaw * h + input  (f32, then cast to output dtype)
    o_ref[...] = (yaw * h + x.astype(jnp.float32)).astype(o_ref.dtype)


def _pick_batch_tile(B, cap=256):
    """Largest tile <= cap that divides B and keeps (8,128) tiling valid."""
    if B <= cap:
        return B                      # tb == full batch dim -> always legal
    for cand in range(cap, 0, -1):    # prefer multiples of 8
        if B % cand == 0 and cand % 8 == 0:
            return cand
    for cand in range(cap, 0, -1):
        if B % cand == 0:
            return cand
    return 1


def branch_forward(x, yaw, w1, b1, w2, b2, *, tb=None, use_bf16=False):
    """x: (B, F) f32; yaw: (B,) f32; w*: (out, in) PyTorch layout; b*: (F,)."""
    B, F = x.shape
    if tb is None:
        tb = _pick_batch_tile(B)
    assert B % tb == 0

    yaw2d = yaw.reshape(B, 1)
    b1_2d = b1.reshape(1, F).astype(jnp.float32)
    b2_2d = b2.reshape(1, F).astype(jnp.float32)

    # One-time wrapper-side transpose: (out, in) -> (in, out), so the kernel
    # never transposes. Optionally cast weights to bf16 for the MXU.
    w_dtype = jnp.bfloat16 if use_bf16 else w1.dtype
    w1t = w1.T.astype(w_dtype)
    w2t = w2.T.astype(w_dtype)

    grid = (B // tb,)
    return pl.pallas_call(
        branch_kernel,
        out_shape=jax.ShapeDtypeStruct((B, F), x.dtype),
        grid_spec=pltpu.PrefetchScalarGridSpec(
            num_scalar_prefetch=0,
            grid=grid,
            in_specs=[
                pl.BlockSpec((tb, F), lambda i: (i, 0)),   # x tile
                pl.BlockSpec((tb, 1), lambda i: (i, 0)),   # yaw tile
                pl.BlockSpec((F, F), lambda i: (0, 0)),    # w1^T (constant block)
                pl.BlockSpec((1, F), lambda i: (0, 0)),    # b1
                pl.BlockSpec((F, F), lambda i: (0, 0)),    # w2^T (constant block)
                pl.BlockSpec((1, F), lambda i: (0, 0)),    # b2
            ],
            out_specs=pl.BlockSpec((tb, F), lambda i: (i, 0)),
        ),
        compiler_params=pltpu.CompilerParams(
            dimension_semantics=("parallel",)
        ),
    )(x, yaw2d, w1t, b1_2d, w2t, b2_2d)


def init_linear(key, feat_dim):
    # Mimic PyTorch nn.Linear default init: U(-1/sqrt(fan_in), 1/sqrt(fan_in))
    kw, kb = jax.random.split(key)
    bound = 1.0 / math.sqrt(feat_dim)
    w = jax.random.uniform(kw, (feat_dim, feat_dim), jnp.float32, -bound, bound)
    b = jax.random.uniform(kb, (feat_dim,), jnp.float32, -bound, bound)
    return w, b


if __name__ == "__main__":
    B, F = 16, 128  # small shapes; single grid step, (16,128) tile is legal

    key = jax.random.PRNGKey(0)
    k_x, k_yaw, k_fc1, k_fc2 = jax.random.split(key, 4)

    x = jax.random.normal(k_x, (B, F), jnp.float32)
    yaw = jax.random.normal(k_yaw, (B,), jnp.float32)

    w1, b1 = init_linear(k_fc1, F)
    w2, b2 = init_linear(k_fc2, F)

    # Pure-JAX reference
    h_ref = jnp.maximum(x @ w1.T + b1, 0.0)
    h_ref = jnp.maximum(h_ref @ w2.T + b2, 0.0)
    ref = yaw[:, None] * h_ref + x

    # f32 path (exact-ish)
    out = branch_forward(x, yaw, w1, b1, w2, b2)
    out = jax.block_until_ready(out)
    assert out.shape == (B, F)
    assert jnp.allclose(out, ref, atol=1e-5, rtol=1e-5), "f32 mismatch vs reference"

    # bf16 MXU path (v6e/v7x fast path): f32 accumulation, loose tolerance
    out_bf16 = branch_forward(x, yaw, w1, b1, w2, b2, use_bf16=True)
    out_bf16 = jax.block_until_ready(out_bf16)
    assert out_bf16.shape == (B, F)
    assert jnp.allclose(out_bf16, ref, atol=1e-1, rtol=1e-1), "bf16 mismatch vs reference"

    print("KERNEL_OK")
</pallas_src>

<mosaic_0001>
module attributes {stable_mosaic.version = 11 : i64} {
  func.func @branch_kernel(%arg0: i32, %arg1: memref<16x128xf32, #tpu.memory_space<vmem>>, %arg2: memref<16x1xf32, #tpu.memory_space<vmem>>, %arg3: memref<128x128xf32, #tpu.memory_space<vmem>>, %arg4: memref<1x128xf32, #tpu.memory_space<vmem>>, %arg5: memref<128x128xf32, #tpu.memory_space<vmem>>, %arg6: memref<1x128xf32, #tpu.memory_space<vmem>>, %arg7: memref<16x128xf32, #tpu.memory_space<vmem>>) attributes {dimension_semantics = [#tpu.dimension_semantics<parallel>], iteration_bounds = array<i64: 1>, scalar_prefetch = 0 : i64, scratch_operands = 0 : i64, tpu.core_type = #tpu.core_type<tc>, window_params = [{transform_indices = @transform_0, window_bounds = array<i64: 16, 128>}, {transform_indices = @transform_1, window_bounds = array<i64: 16, 1>}, {pipeline_mode = #tpu.pipeline_mode<synchronous>, transform_indices = @transform_2, window_bounds = array<i64: 128, 128>}, {pipeline_mode = #tpu.pipeline_mode<synchronous>, transform_indices = @transform_3, window_bounds = array<i64: 1, 128>}, {pipeline_mode = #tpu.pipeline_mode<synchronous>, transform_indices = @transform_4, window_bounds = array<i64: 128, 128>}, {pipeline_mode = #tpu.pipeline_mode<synchronous>, transform_indices = @transform_5, window_bounds = array<i64: 1, 128>}, {transform_indices = @transform_6, window_bounds = array<i64: 16, 128>}]} {
    %c0 = arith.constant 0 : index
    %c0_0 = arith.constant 0 : index
    %0 = vector.load %arg1[%c0, %c0_0] : memref<16x128xf32, #tpu.memory_space<vmem>>, vector<16x128xf32>
    %c0_1 = arith.constant 0 : index
    %c0_2 = arith.constant 0 : index
    %1 = vector.load %arg2[%c0_1, %c0_2] : memref<16x1xf32, #tpu.memory_space<vmem>>, vector<16x1xf32>
    %c0_3 = arith.constant 0 : index
    %c0_4 = arith.constant 0 : index
    %2 = vector.load %arg3[%c0_3, %c0_4] : memref<128x128xf32, #tpu.memory_space<vmem>>, vector<128x128xf32>
    %cst = arith.constant dense<0.000000e+00> : vector<16x128xf32>
    %3 = tpu.matmul %0, %2, %cst {dimension_numbers = #tpu.dot_dimension_numbers<[1], [0], [0], [1], [0, 0, 1, 1], [], []>} : vector<16x128xf32>, vector<128x128xf32>, vector<16x128xf32> -> vector<16x128xf32>
    %c0_5 = arith.constant 0 : index
    %c0_6 = arith.constant 0 : index
    %4 = vector.load %arg4[%c0_5, %c0_6] : memref<1x128xf32, #tpu.memory_space<vmem>>, vector<1x128xf32>
    %5 = vector.broadcast %4 : vector<1x128xf32> to vector<16x128xf32>
    %6 = arith.addf %3, %5 : vector<16x128xf32>
    %cst_7 = arith.constant 0.000000e+00 : f32
    %7 = vector.broadcast %cst_7 : f32 to vector<16x128xf32>
    %8 = arith.maximumf %6, %7 : vector<16x128xf32>
    %c0_8 = arith.constant 0 : index
    %c0_9 = arith.constant 0 : index
    %9 = vector.load %arg5[%c0_8, %c0_9] : memref<128x128xf32, #tpu.memory_space<vmem>>, vector<128x128xf32>
    %cst_10 = arith.constant dense<0.000000e+00> : vector<16x128xf32>
    %10 = tpu.matmul %8, %9, %cst_10 {dimension_numbers = #tpu.dot_dimension_numbers<[1], [0], [0], [1], [0, 0, 1, 1], [], []>} : vector<16x128xf32>, vector<128x128xf32>, vector<16x128xf32> -> vector<16x128xf32>
    %c0_11 = arith.constant 0 : index
    %c0_12 = arith.constant 0 : index
    %11 = vector.load %arg6[%c0_11, %c0_12] : memref<1x128xf32, #tpu.memory_space<vmem>>, vector<1x128xf32>
    %12 = vector.broadcast %11 : vector<1x128xf32> to vector<16x128xf32>
    %13 = arith.addf %10, %12 : vector<16x128xf32>
    %cst_13 = arith.constant 0.000000e+00 : f32
    %14 = vector.broadcast %cst_13 : f32 to vector<16x128xf32>
    %15 = arith.maximumf %13, %14 : vector<16x128xf32>
    %16 = vector.broadcast %1 : vector<16x1xf32> to vector<16x128xf32>
    %17 = arith.mulf %16, %15 : vector<16x128xf32>
    %18 = arith.addf %17, %0 : vector<16x128xf32>
    %c0_14 = arith.constant 0 : index
    %c0_15 = arith.constant 0 : index
    %19 = vector.load %arg7[%c0_14, %c0_15] : memref<16x128xf32, #tpu.memory_space<vmem>>, vector<16x128xf32>
    tpu.vector_store %arg7[%c0_14, %c0_15], %18 {strides = array<i32>} : memref<16x128xf32, #tpu.memory_space<vmem>>, vector<16x128xf32>,
    return
  }
  func.func @transform_0(%arg0: i32) -> (i32, i32) {
    %c0_i32 = arith.constant 0 : i32
    %c0_i32_0 = arith.constant 0 : i32
    return %arg0, %c0_i32 : i32, i32
  }
  func.func @transform_1(%arg0: i32) -> (i32, i32) {
    %c0_i32 = arith.constant 0 : i32
    %c0_i32_0 = arith.constant 0 : i32
    return %arg0, %c0_i32 : i32, i32
  }
  func.func @transform_2(%arg0: i32) -> (i32, i32) {
    %c0_i32 = arith.constant 0 : i32
    %c0_i32_0 = arith.constant 0 : i32
    %c0_i32_1 = arith.constant 0 : i32
    return %c0_i32, %c0_i32_0 : i32, i32
  }
  func.func @transform_3(%arg0: i32) -> (i32, i32) {
    %c0_i32 = arith.constant 0 : i32
    %c0_i32_0 = arith.constant 0 : i32
    %c0_i32_1 = arith.constant 0 : i32
    return %c0_i32, %c0_i32_0 : i32, i32
  }
  func.func @transform_4(%arg0: i32) -> (i32, i32) {
    %c0_i32 = arith.constant 0 : i32
    %c0_i32_0 = arith.constant 0 : i32
    %c0_i32_1 = arith.constant 0 : i32
    return %c0_i32, %c0_i32_0 : i32, i32
  }
  func.func @transform_5(%arg0: i32) -> (i32, i32) {
    %c0_i32 = arith.constant 0 : i32
    %c0_i32_0 = arith.constant 0 : i32
    %c0_i32_1 = arith.constant 0 : i32
    return %c0_i32, %c0_i32_0 : i32, i32
  }
  func.func @transform_6(%arg0: i32) -> (i32, i32) {
    %c0_i32 = arith.constant 0 : i32
    %c0_i32_0 = arith.constant 0 : i32
    return %arg0, %c0_i32 : i32, i32
  }
}

</mosaic_0001>

<llo_original>
// kernel: tpu_custom_call.1
$region0: #{tpu_custom_call.1}
  #allocation0 [shape = 'u32[]', space=smem, size = 0x4, offset = 0x4, fixed_abs, tag = 'smem constant byte address 0x4 - core index']
  #allocation1 [shape = 'u32[144,128]{1,0:T(1,128)}', space=vmem, size = 0x12000, scoped, tag = 'internal scratch']
  %s0 = inlined_call_operand.vmem [shape: f32[16,128], index: 0, kind: input, shape index: {}]
  %s1 = inlined_call_operand.vmem [shape: f32[16,1], index: 1, kind: input, shape index: {}]
  %s2 = inlined_call_operand.hbm [shape: f32[128,128], index: 2, kind: input, shape index: {}]
  %s3 = inlined_call_operand.vmem [shape: f32[1,128], index: 3, kind: input, shape index: {}]
  %s4 = inlined_call_operand.hbm [shape: f32[128,128], index: 4, kind: input, shape index: {}]
  %s5 = inlined_call_operand.vmem [shape: f32[1,128], index: 5, kind: input, shape index: {}]
  %s6 = inlined_call_operand.hbm [shape: f32[16,128], index: 6, kind: output, shape index: {}]
  %s7 = sld [smem:[#allocation0]]
  $region42: #{tpu_custom_call.1} parent=0
    _
  %s9 = ssub.s32 1, %s7
  %s10 = scalar_select 0, %s9, %s7
  $region1: #{tpu_custom_call.1} parent=0
    #allocation2 [shape = 'u8[65536]{0}', space=vmem, size = 0x10000, scoped, tag = 'input window, operand 2, single buffered']
    #allocation3 [shape = 's32[1]{0}', space=sflag, size = 0x4, scoped, tag = 'scoped memory for tpu_custom_call.1']
    #allocation4 [shape = 's32[1]{0}', space=sflag, size = 0x4, scoped, tag = 'scoped memory for tpu_custom_call.1']
    #allocation5 [shape = 'u8[65536]{0}', space=vmem, size = 0x10000, scoped, tag = 'input window, operand 4, single buffered']
    #allocation6 [shape = 's32[1]{0}', space=sflag, size = 0x4, scoped, tag = 'scoped memory for tpu_custom_call.1']
    #allocation7 [shape = 'u8[8192]{0}', space=vmem, size = 0x2000, scoped, tag = 'output window, operand 0, single buffered']
    %11 = vsyncpa [#allocation3], 0
    %12 = vsyncpa [#allocation6], 0
    %13 = vsyncpa [#allocation4], 0
    // Predicated region
    $region2: #{tpu_custom_call.1} parent=1 // pred_check
      _
    $region3: #{tpu_custom_call.1} parent=1 // pred_check_branch
      %15 = sbr.rel (0) target = $region5
    $region4: #{tpu_custom_call.1} parent=1 // pred_region
      _
    $region5: #{tpu_custom_call.1} parent=1 // pred_fallthru
      _
    // Predicated region
    $region6: #{tpu_custom_call.1} parent=1 // pred_check
      _
    $region7: #{tpu_custom_call.1} parent=1 // pred_check_branch
      %17 = sbr.rel (0) target = $region9
    $region8: #{tpu_custom_call.1} parent=1 // pred_region
      _
    $region9: #{tpu_custom_call.1} parent=1 // pred_fallthru
      _
    // Predicated region
    $region10: #{tpu_custom_call.1} parent=1 // pred_check
      _
    $region11: #{tpu_custom_call.1} parent=1 // pred_check_branch
      %19 = sbr.rel (0) target = $region13
    $region12: #{tpu_custom_call.1} parent=1 // pred_region
      %s21 = ssub.s32 2048, 2048
      %22 = vsyncadd [#allocation3], %s21
      %s23 = sshll.u32 [#allocation2], 4
      %s24 = int_to_ptr.vmem [resolvable:$true] %s23
      %29 = dma.hbm_to_vmem [thread:$0]  %s2, 2048, %s24, [#allocation3], 128, 128, 8
    $region13: #{tpu_custom_call.1} parent=1 // pred_fallthru
      _
    // Predicated region
    $region14: #{tpu_custom_call.1} parent=1 // pred_check
      _
    $region15: #{tpu_custom_call.1} parent=1 // pred_check_branch
      %31 = sbr.rel (0) target = $region17
    $region16: #{tpu_custom_call.1} parent=1 // pred_region
      _
    $region17: #{tpu_custom_call.1} parent=1 // pred_fallthru
      _
    // Predicated region
    $region18: #{tpu_custom_call.1} parent=1 // pred_check
      _
    $region19: #{tpu_custom_call.1} parent=1 // pred_check_branch
      %33 = sbr.rel (0) target = $region21
    $region20: #{tpu_custom_call.1} parent=1 // pred_region
      %s35 = ssub.s32 2048, 2048
      %36 = vsyncadd [#allocation6], %s35
      %s37 = sshll.u32 [#allocation5], 4
      %s38 = int_to_ptr.vmem [resolvable:$true] %s37
      %43 = dma.hbm_to_vmem [thread:$0]  %s4, 2048, %s38, [#allocation6], 128, 128, 8
    $region21: #{tpu_custom_call.1} parent=1 // pred_fallthru
      _
    // Predicated region
    $region22: #{tpu_custom_call.1} parent=1 // pred_check
      _
    $region23: #{tpu_custom_call.1} parent=1 // pred_check_branch
      %45 = sbr.rel (0) target = $region25
    $region24: #{tpu_custom_call.1} parent=1 // pred_region
      _
    $region25: #{tpu_custom_call.1} parent=1 // pred_fallthru
      _
    // Predicated region
    $region26: #{tpu_custom_call.1} parent=1 // pred_check
      _
    $region27: #{tpu_custom_call.1} parent=1 // pred_check_branch
      %47 = sbr.rel (0) target = $region29
    $region28: #{tpu_custom_call.1} parent=1 // pred_region
      %48 = dma.done [#allocation3], 2048
    $region29: #{tpu_custom_call.1} parent=1 // pred_fallthru
      _
    // Predicated region
    $region30: #{tpu_custom_call.1} parent=1 // pred_check
      _
    $region31: #{tpu_custom_call.1} parent=1 // pred_check_branch
      %50 = sbr.rel (0) target = $region33
    $region32: #{tpu_custom_call.1} parent=1 // pred_region
      %51 = dma.done [#allocation6], 2048
    $region33: #{tpu_custom_call.1} parent=1 // pred_fallthru
      _
    %v52 = vld [vmem:[%s0] sm:$0xff]
    %v53 = vld [vmem:[%s0 + $0x8] sm:$0xff]
    %v54 = vld [vmem:[%s1] sm:$0xff]
    %v55 = vld [vmem:[%s1 + $0x8] sm:$0xff]
    %v56 = vld [vmem:[#allocation2] sm:$0xff]
    %v57 = vld [vmem:[#allocation2 + $0x8] sm:$0xff]
    %v58 = vld [vmem:[#allocation2 + $0x10] sm:$0xff]
    %v59 = vld [vmem:[#allocation2 + $0x18] sm:$0xff]
    %v60 = vld [vmem:[#allocation2 + $0x20] sm:$0xff]
    %v61 = vld [vmem:[#allocation2 + $0x28] sm:$0xff]
    %v62 = vld [vmem:[#allocation2 + $0x30] sm:$0xff]
    %v63 = vld [vmem:[#allocation2 + $0x38] sm:$0xff]
    %v64 = vld [vmem:[#allocation2 + $0x40] sm:$0xff]
    %v65 = vld [vmem:[#allocation2 + $0x48] sm:$0xff]
    %v66 = vld [vmem:[#allocation2 + $0x50] sm:$0xff]
    %v67 = vld [vmem:[#allocation2 + $0x58] sm:$0xff]
    %v68 = vld [vmem:[#allocation2 + $0x60] sm:$0xff]
    %v69 = vld [vmem:[#allocation2 + $0x68] sm:$0xff]
    %v70 = vld [vmem:[#allocation2 + $0x70] sm:$0xff]
    %v71 = vld [vmem:[#allocation2 + $0x78] sm:$0xff]
    %v72 = vld [vmem:[%s3] sm:$0x1]
    %v74 = vlaneseq
    %v75 = vshrl.u32 %v74, 7
    %v76 = vsub.s32 0, %v75
    %v77 = vrot.slane %v72, %v76
    %79 = vmatprep.subr.mxu0 0.0
    %80 = vmatpush1.msra.mxu0 %v56
    %81 = vmatprep.subr.mxu0 0.0
    %82 = vmatpush1.msra.mxu0 %v57
    %83 = vmatprep.subr.mxu0 0.0
    %84 = vmatpush1.msra.mxu0 %v58
    %85 = vmatprep.subr.mxu0 0.0
    %86 = vmatpush1.msra.mxu0 %v59
    %87 = vmatprep.subr.mxu0 0.0
    %88 = vmatpush1.msra.mxu0 %v60
    %89 = vmatprep.subr.mxu0 0.0
    %90 = vmatpush1.msra.mxu0 %v61
    %91 = vmatprep.subr.mxu0 0.0
    %92 = vmatpush1.msra.mxu0 %v62
    %93 = vmatprep.subr.mxu0 0.0
    %94 = vmatpush1.msra.mxu0 %v63
    %95 = vmatprep.subr.mxu0 0.0
    %96 = vmatpush1.msra.mxu0 %v64
    %97 = vmatprep.subr.mxu0 0.0
    %98 = vmatpush1.msra.mxu0 %v65
    %99 = vmatprep.subr.mxu0 0.0
    %100 = vmatpush1.msra.mxu0 %v66
    %101 = vmatprep.subr.mxu0 0.0
    %102 = vmatpush1.msra.mxu0 %v67
    %103 = vmatprep.subr.mxu0 0.0
    %104 = vmatpush1.msra.mxu0 %v68
    %105 = vmatprep.subr.mxu0 0.0
    %106 = vmatpush1.msra.mxu0 %v69
    %107 = vmatprep.subr.mxu0 0.0
    %108 = vmatpush1.msra.mxu0 %v70
    %109 = vmatprep.subr.mxu0 0.0
    %110 = vmatpush1.msra.mxu0 %v71
    %111 = vmatprep.subr.mxu0 0.0
    %112 = vmatpush1.msra.mxu0 0.0
    %113 = vmatprep.subr.mxu0 0.0
    %114 = vmatpush1.msra.mxu0 0.0
    %115 = vmatprep.subr.mxu0 0.0
    %116 = vmatpush1.msra.mxu0 0.0
    %117 = vmatprep.subr.mxu0 0.0
    %118 = vmatpush1.msra.mxu0 0.0
    %119 = vmatprep.subr.mxu0 0.0
    %120 = vmatpush1.msra.mxu0 0.0
    %121 = vmatprep.subr.mxu0 0.0
    %122 = vmatpush1.msra.mxu0 0.0
    %123 = vmatprep.subr.mxu0 0.0
    %124 = vmatpush1.msra.mxu0 0.0
    %125 = vmatprep.subr.mxu0 0.0
    %126 = vmatpush1.msra.mxu0 0.0
    %127 = vmatprep.subr.mxu0 0.0
    %128 = vmatpush1.msra.mxu0 0.0
    %129 = vmatprep.subr.mxu0 0.0
    %130 = vmatpush1.msra.mxu0 0.0
    %131 = vmatprep.subr.mxu0 0.0
    %132 = vmatpush1.msra.mxu0 0.0
    %133 = vmatprep.subr.mxu0 0.0
    %134 = vmatpush1.msra.mxu0 0.0
    %135 = vmatprep.subr.mxu0 0.0
    %136 = vmatpush1.msra.mxu0 0.0
    %137 = vmatprep.subr.mxu0 0.0
    %138 = vmatpush1.msra.mxu0 0.0
    %139 = vmatprep.subr.mxu0 0.0
    %140 = vmatpush1.msra.mxu0 0.0
    %141 = vmatprep.subr.mxu0 0.0
    %142 = vmatpush1.msra.mxu0 0.0
    %143 = vmatprep.mubr.f32.mxu0 0.0
    %144 = vmatmul.mubr.f32.gmra.mrb[0].mxu0 %v52
    %v145 = vpop.f32.mrb[0].mxu0
    %v146 = vadd.f32 %v77, %v145
    %v147 = vpop.f32.mrb[0].mxu0
    %148 = vmatprep.mubr.f32.mxu0 0.0
    %149 = vmatmul.mubr.f32.gmra.mrb[0].mxu0 %v53
    %v150 = vpop.f32.mrb[0].mxu0
    %v151 = vadd.f32 %v77, %v150
    %v152 = vpop.f32.mrb[0].mxu0
    %153 = vdwg.mxu0
    %v154 = vmax.f32 %v146, 0.0
    %v155 = vmax.f32 %v151, 0.0
    %v156 = vld [vmem:[#allocation5] sm:$0xff]
    %v157 = vld [vmem:[#allocation5 + $0x8] sm:$0xff]
    %v158 = vld [vmem:[#allocation5 + $0x10] sm:$0xff]
    %v159 = vld [vmem:[#allocation5 + $0x18] sm:$0xff]
    %v160 = vld [vmem:[#allocation5 + $0x20] sm:$0xff]
    %v161 = vld [vmem:[#allocation5 + $0x28] sm:$0xff]
    %v162 = vld [vmem:[#allocation5 + $0x30] sm:$0xff]
    %v163 = vld [vmem:[#allocation5 + $0x38] sm:$0xff]
    %v164 = vld [vmem:[#allocation5 + $0x40] sm:$0xff]
    %v165 = vld [vmem:[#allocation5 + $0x48] sm:$0xff]
    %v166 = vld [vmem:[#allocation5 + $0x50] sm:$0xff]
    %v167 = vld [vmem:[#allocation5 + $0x58] sm:$0xff]
    %v168 = vld [vmem:[#allocation5 + $0x60] sm:$0xff]
    %v169 = vld [vmem:[#allocation5 + $0x68] sm:$0xff]
    %v170 = vld [vmem:[#allocation5 + $0x70] sm:$0xff]
    %v171 = vld [vmem:[#allocation5 + $0x78] sm:$0xff]
    %v172 = vld [vmem:[%s5] sm:$0x1]
    %v174 = vlaneseq
    %v175 = vshrl.u32 %v174, 7
    %v176 = vsub.s32 0, %v175
    %v177 = vrot.slane %v172, %v176
    %179 = vmatprep.subr.mxu0 0.0
    %180 = vmatpush1.msra.mxu0 %v156
    %181 = vmatprep.subr.mxu0 0.0
    %182 = vmatpush1.msra.mxu0 %v157
    %183 = vmatprep.subr.mxu0 0.0
    %184 = vmatpush1.msra.mxu0 %v158
    %185 = vmatprep.subr.mxu0 0.0
    %186 = vmatpush1.msra.mxu0 %v159
    %187 = vmatprep.subr.mxu0 0.0
    %188 = vmatpush1.msra.mxu0 %v160
    %189 = vmatprep.subr.mxu0 0.0
    %190 = vmatpush1.msra.mxu0 %v161
    %191 = vmatprep.subr.mxu0 0.0
    %192 = vmatpush1.msra.mxu0 %v162
    %193 = vmatprep.subr.mxu0 0.0
    %194 = vmatpush1.msra.mxu0 %v163
    %195 = vmatprep.subr.mxu0 0.0
    %196 = vmatpush1.msra.mxu0 %v164
    %197 = vmatprep.subr.mxu0 0.0
    %198 = vmatpush1.msra.mxu0 %v165
    %199 = vmatprep.subr.mxu0 0.0
    %200 = vmatpush1.msra.mxu0 %v166
    %201 = vmatprep.subr.mxu0 0.0
    %202 = vmatpush1.msra.mxu0 %v167
    %203 = vmatprep.subr.mxu0 0.0
    %204 = vmatpush1.msra.mxu0 %v168
    %205 = vmatprep.subr.mxu0 0.0
    %206 = vmatpush1.msra.mxu0 %v169
    %207 = vmatprep.subr.mxu0 0.0
    %208 = vmatpush1.msra.mxu0 %v170
    %209 = vmatprep.subr.mxu0 0.0
    %210 = vmatpush1.msra.mxu0 %v171
    %211 = vmatprep.subr.mxu0 0.0
    %212 = vmatpush1.msra.mxu0 0.0
    %213 = vmatprep.subr.mxu0 0.0
    %214 = vmatpush1.msra.mxu0 0.0
    %215 = vmatprep.subr.mxu0 0.0
    %216 = vmatpush1.msra.mxu0 0.0
    %217 = vmatprep.subr.mxu0 0.0
    %218 = vmatpush1.msra.mxu0 0.0
    %219 = vmatprep.subr.mxu0 0.0
    %220 = vmatpush1.msra.mxu0 0.0
    %221 = vmatprep.subr.mxu0 0.0
    %222 = vmatpush1.msra.mxu0 0.0
    %223 = vmatprep.subr.mxu0 0.0
    %224 = vmatpush1.msra.mxu0 0.0
    %225 = vmatprep.subr.mxu0 0.0
    %226 = vmatpush1.msra.mxu0 0.0
    %227 = vmatprep.subr.mxu0 0.0
    %228 = vmatpush1.msra.mxu0 0.0
    %229 = vmatprep.subr.mxu0 0.0
    %230 = vmatpush1.msra.mxu0 0.0
    %231 = vmatprep.subr.mxu0 0.0
    %232 = vmatpush1.msra.mxu0 0.0
    %233 = vmatprep.subr.mxu0 0.0
    %234 = vmatpush1.msra.mxu0 0.0
    %235 = vmatprep.subr.mxu0 0.0
    %236 = vmatpush1.msra.mxu0 0.0
    %237 = vmatprep.subr.mxu0 0.0
    %238 = vmatpush1.msra.mxu0 0.0
    %239 = vmatprep.subr.mxu0 0.0
    %240 = vmatpush1.msra.mxu0 0.0
    %241 = vmatprep.subr.mxu0 0.0
    %242 = vmatpush1.msra.mxu0 0.0
    %243 = vmatprep.mubr.f32.mxu0 0.0
    %244 = vmatmul.mubr.f32.gmra.mrb[0].mxu0 %v154
    %v245 = vpop.f32.mrb[0].mxu0
    %v246 = vadd.f32 %v177, %v245
    %v247 = vpop.f32.mrb[0].mxu0
    %248 = vmatprep.mubr.f32.mxu0 0.0
    %249 = vmatmul.mubr.f32.gmra.mrb[0].mxu0 %v155
    %v250 = vpop.f32.mrb[0].mxu0
    %v251 = vadd.f32 %v177, %v250
    %v252 = vpop.f32.mrb[0].mxu0
    %253 = vdwg.mxu0
    %v254 = vmax.f32 %v246, 0.0
    %v255 = vmax.f32 %v251, 0.0
    %257 = vset.pattern.permute.xlu0 0
    %258 = vperm.xlu0 %257, %v54
    %v259 = vpop.permute.xlu0 %258
    %262 = vset.pattern.permute.xlu0 0
    %263 = vperm.xlu0 %262, %v55
    %v264 = vpop.permute.xlu0 %263
    %v266 = vmul.f32 %v259, %v254
    %v267 = vmul.f32 %v264, %v255
    %v268 = vadd.f32 %v266, %v52
    %v269 = vadd.f32 %v267, %v53
    %270 = vst [vmem:[#allocation7] sm:$0xff] %v268
    %271 = vst [vmem:[#allocation7 + $0x8] sm:$0xff] %v269
    // Predicated region
    $region34: #{tpu_custom_call.1} parent=1 // pred_check
      _
    $region35: #{tpu_custom_call.1} parent=1 // pred_check_branch
      %273 = sbr.rel (0) target = $region37
    $region36: #{tpu_custom_call.1} parent=1 // pred_region
      %s275 = ssub.s32 256, 256
      %276 = vsyncadd [#allocation4], %s275
      %s277 = sshll.u32 [#allocation7], 4
      %s278 = int_to_ptr.vmem [resolvable:$true] %s277
      %283 = dma.vmem_to_hbm [thread:$0]  %s278, 256, %s6, [#allocation4], 128, 128, 8
    $region37: #{tpu_custom_call.1} parent=1 // pred_fallthru
      _
    // Predicated region
    $region38: #{tpu_custom_call.1} parent=1 // pred_check
      _
    $region39: #{tpu_custom_call.1} parent=1 // pred_check_branch
      %285 = sbr.rel (0) target = $region41
    $region40: #{tpu_custom_call.1} parent=1 // pred_region
      %286 = dma.done [#allocation4], 256
    $region41: #{tpu_custom_call.1} parent=1 // pred_fallthru
      _
    %287 = vsyncpa [#allocation3], 1
    %288 = vsyncpa [#allocation6], 1
    %289 = vsyncpa [#allocation4], 1

</llo_original>
